<compile_context>
chip_gen: v7x
topology: tpu7x:2x2x1
jax: 0.10.0
libtpu: 0.0.40
codegen_flags: <defaults>
</compile_context>

<pallas_src>
import functools

import jax
import jax.numpy as jnp
import numpy as np
from jax.experimental import pallas as pl
from jax.experimental.pallas import tpu as pltpu


def _round_up(x, m):
    return ((x + m - 1) // m) * m


def _multiclass_kernel(pooled_ref, wa_ref, ba_ref, wh_ref, bh_ref, out_ref):
    # pooled_ref: [TILE_B, C]   wa_ref: [C, C]   ba_ref: [1, C]
    # wh_ref    : [C, K_pad]    bh_ref: [1, K_pad]        out_ref: [TILE_B, K_pad]
    pooled = pooled_ref[...]                                        # f32

    # attention_weights = softmax(Linear(pooled), dim=-1)
    logits = jnp.dot(pooled, wa_ref[...],
                     preferred_element_type=jnp.float32) + ba_ref[...]
    m = jnp.max(logits, axis=-1, keepdims=True)
    e = jnp.exp(logits - m)
    denom = jnp.sum(e, axis=-1, keepdims=True)
    attn = e * pl.reciprocal(denom, approx=True)                    # EUP vrcp (free slot)

    x_att = pooled * attn                                           # [TILE_B, C]
    # Dropout(0.1): identity at inference time.
    # TODO(synk): training-mode dropout mask (p=0.1 with 1/(1-p) scaling via pltpu.prng_*).

    # All output heads fused into a single lane-dense matmul (one unmasked vst per tile).
    out = jnp.dot(x_att, wh_ref[...],
                  preferred_element_type=jnp.float32) + bh_ref[...]
    out_ref[...] = out.astype(out_ref.dtype)


@functools.partial(jax.jit, static_argnames=("tile_b", "core_parallel"))
def multiclass_forward_kernel(pooled, wa, ba, wh_fused, bh_fused, *,
                              tile_b=512, core_parallel=False):
    """pooled: [B, C] column-mean of encoded features; returns [B, K_pad] fused logits."""
    B, C = pooled.shape
    K_pad = wh_fused.shape[1]

    tile_b = min(tile_b, _round_up(B, 8))       # small batches: one 8-row-aligned tile
    B_pad = _round_up(B, tile_b)
    if B_pad != B:
        # Only the small pooled [B, C] tensor is copied here (x never enters the kernel).
        pooled = jnp.pad(pooled, ((0, B_pad - B), (0, 0)))

    num_tiles = B_pad // tile_b
    # On v7x, core_parallel=True shards the batch axis across both TensorCores
    # (requires >= 2 tiles).  Default off for portability across v5e/v6e.
    sem = pltpu.CORE_PARALLEL if (core_parallel and num_tiles >= 2) else pltpu.PARALLEL

    out = pl.pallas_call(
        _multiclass_kernel,
        out_shape=jax.ShapeDtypeStruct((B_pad, K_pad), jnp.float32),
        grid=(num_tiles,),
        in_specs=[
            pl.BlockSpec((tile_b, C), lambda i: (i, 0)),   # batch-tiled pooled features
            pl.BlockSpec((C, C), lambda i: (0, 0)),        # VMEM-resident weights
            pl.BlockSpec((1, C), lambda i: (0, 0)),
            pl.BlockSpec((C, K_pad), lambda i: (0, 0)),
            pl.BlockSpec((1, K_pad), lambda i: (0, 0)),
        ],
        out_specs=pl.BlockSpec((tile_b, K_pad), lambda i: (i, 0)),
        compiler_params=pltpu.CompilerParams(dimension_semantics=(sem,)),
    )(pooled, wa, ba, wh_fused, bh_fused)
    return out[:B]


def encode_and_pool(x_num, x_cat, w_num, b_num, emb_table, emb_offsets):
    """StypeWiseFeatureEncoder + x.mean(dim=1), fused (plain-JAX glue).

    numerical LinearEncoder : x[:, j, :] = x_num[:, j] * w_num[j] + b_num[j]
    categorical EmbeddingEncoder : per-column embedding lookup
    Returns pooled [B, C] = mean over all encoded columns (the only way x is consumed).
    """
    x_n = x_num[:, :, None] * w_num[None, :, :] + b_num[None, :, :]   # [B, Nnum, C]
    idx = x_cat + emb_offsets[None, :]                                # [B, Ncat]
    x_c = emb_table[idx]                                              # [B, Ncat, C]
    nc = x_n.shape[1] + x_c.shape[1]
    pooled = (jnp.sum(x_n, axis=1) + jnp.sum(x_c, axis=1)) * (1.0 / nc)
    return pooled.astype(jnp.float32)


def fuse_output_heads(head_weights, head_biases, lane_pad=128):
    """Pack per-head Linear(C, k_i) params into one [C, K_pad] / [1, K_pad] pair.

    K_pad is a multiple of `lane_pad` so the kernel output stays lane-dense; padded
    columns are zero and sliced off in the wrapper.
    """
    offsets, total = [], 0
    for w in head_weights:
        offsets.append(total)
        total += w.shape[1]
    C = head_weights[0].shape[0]
    K_pad = _round_up(max(total, 1), lane_pad)
    wh = jnp.zeros((C, K_pad), jnp.float32)
    bh = jnp.zeros((1, K_pad), jnp.float32)
    for off, w, b in zip(offsets, head_weights, head_biases):
        k = w.shape[1]
        wh = wh.at[:, off:off + k].set(w)
        bh = bh.at[0, off:off + k].set(b)
    return wh, bh, offsets


def _reference_heads(pooled, wa, ba, head_ws, head_bs):
    """Exact f32 reference of the post-encoder forward (softmax gating + heads)."""
    logits = pooled @ wa + ba
    attn = jax.nn.softmax(logits, axis=-1)
    x_att = pooled * attn
    return [x_att @ w + b[None, :] for w, b in zip(head_ws, head_bs)]


if __name__ == "__main__":
    # Small, deterministic configuration.
    B = 2                     # batch
    C = 32                    # channels
    N_NUM = 3                 # numerical columns
    CAT_CARDS = [5, 7]        # categorical column cardinalities
    N_CAT = len(CAT_CARDS)
    target_configs = {"target_a": {"num_classes": 3},
                      "target_b": {"num_classes": 5}}

    key = jax.random.PRNGKey(0)
    keys = jax.random.split(key, 16)

    # ---- parameters (deterministic init) ----
    w_num = jax.random.normal(keys[0], (N_NUM, C), jnp.float32) * 0.1
    b_num = jax.random.normal(keys[1], (N_NUM, C), jnp.float32) * 0.01
    emb_table = jax.random.normal(keys[2], (sum(CAT_CARDS), C), jnp.float32) * 0.1
    emb_offsets = jnp.array([0] + list(jnp.cumsum(jnp.array(CAT_CARDS[:-1]))),
                            dtype=jnp.int32)

    wa = jax.random.normal(keys[3], (C, C), jnp.float32) * (1.0 / jnp.sqrt(C))
    ba = jax.random.normal(keys[4], (1, C), jnp.float32) * 0.01

    head_ws, head_bs = [], []
    for i, (name, cfg) in enumerate(target_configs.items()):
        k = cfg["num_classes"]
        head_ws.append(
            jax.random.normal(keys[5 + i], (C, k), jnp.float32) * (1.0 / jnp.sqrt(C)))
        head_bs.append(
            jax.random.normal(keys[7 + i], (k,), jnp.float32) * 0.01)
    wh_fused, bh_fused, head_offsets = fuse_output_heads(head_ws, head_bs)

    # ---- synthetic TensorFrame inputs (small case) ----
    x_num = jax.random.normal(keys[9], (B, N_NUM), jnp.float32)
    x_cat = jnp.array([[1, 3], [4, 0]], dtype=jnp.int32)              # [B, N_CAT]

    # ---- forward (small case) ----
    pooled = encode_and_pool(x_num, x_cat, w_num, b_num, emb_table, emb_offsets)
    out = multiclass_forward_kernel(pooled, wa, ba, wh_fused, bh_fused)
    out = jax.block_until_ready(out)

    outputs = {}
    refs = _reference_heads(pooled, wa, ba, head_ws, head_bs)
    for i, (name, cfg) in enumerate(target_configs.items()):
        k = cfg["num_classes"]
        off = head_offsets[i]
        outputs[name] = out[:, off:off + k]
        np.testing.assert_allclose(np.asarray(outputs[name]), np.asarray(refs[i]),
                                   rtol=2e-2, atol=2e-3)
    assert outputs["target_a"].shape == (B, 3)
    assert outputs["target_b"].shape == (B, 5)

    # ---- larger batch: exercise the 512-row tiled grid path ----
    B_L = 2048
    x_num_l = jax.random.normal(keys[10], (B_L, N_NUM), jnp.float32)
    x_cat_l = jnp.stack(
        [jax.random.randint(keys[11], (B_L,), 0, CAT_CARDS[0]),
         jax.random.randint(keys[12], (B_L,), 0, CAT_CARDS[1])], axis=1
    ).astype(jnp.int32)
    pooled_l = encode_and_pool(x_num_l, x_cat_l, w_num, b_num, emb_table, emb_offsets)
    out_l = multiclass_forward_kernel(pooled_l, wa, ba, wh_fused, bh_fused, tile_b=512)
    out_l = jax.block_until_ready(out_l)
    refs_l = _reference_heads(pooled_l, wa, ba, head_ws, head_bs)
    for i, (name, cfg) in enumerate(target_configs.items()):
        k = cfg["num_classes"]
        off = head_offsets[i]
        np.testing.assert_allclose(np.asarray(out_l[:, off:off + k]),
                                   np.asarray(refs_l[i]), rtol=2e-2, atol=2e-3)

    print("KERNEL_OK")
</pallas_src>

<mosaic_0001>
module attributes {stable_mosaic.version = 11 : i64} {
  func.func @_multiclass_kernel(%arg0: i32, %arg1: memref<8x32xf32, #tpu.memory_space<vmem>>, %arg2: memref<32x32xf32, #tpu.memory_space<vmem>>, %arg3: memref<1x32xf32, #tpu.memory_space<vmem>>, %arg4: memref<32x128xf32, #tpu.memory_space<vmem>>, %arg5: memref<1x128xf32, #tpu.memory_space<vmem>>, %arg6: memref<8x128xf32, #tpu.memory_space<vmem>>) attributes {dimension_semantics = [#tpu.dimension_semantics<parallel>], iteration_bounds = array<i64: 1>, scalar_prefetch = 0 : i64, scratch_operands = 0 : i64, tpu.core_type = #tpu.core_type<tc>, window_params = [{transform_indices = @transform_0, window_bounds = array<i64: 8, 32>}, {pipeline_mode = #tpu.pipeline_mode<synchronous>, transform_indices = @transform_1, window_bounds = array<i64: 32, 32>}, {pipeline_mode = #tpu.pipeline_mode<synchronous>, transform_indices = @transform_2, window_bounds = array<i64: 1, 32>}, {pipeline_mode = #tpu.pipeline_mode<synchronous>, transform_indices = @transform_3, window_bounds = array<i64: 32, 128>}, {pipeline_mode = #tpu.pipeline_mode<synchronous>, transform_indices = @transform_4, window_bounds = array<i64: 1, 128>}, {transform_indices = @transform_5, window_bounds = array<i64: 8, 128>}]} {
    %c0 = arith.constant 0 : index
    %c0_0 = arith.constant 0 : index
    %0 = vector.load %arg1[%c0, %c0_0] : memref<8x32xf32, #tpu.memory_space<vmem>>, vector<8x32xf32>
    %c0_1 = arith.constant 0 : index
    %c0_2 = arith.constant 0 : index
    %1 = vector.load %arg2[%c0_1, %c0_2] : memref<32x32xf32, #tpu.memory_space<vmem>>, vector<32x32xf32>
    %cst = arith.constant dense<0.000000e+00> : vector<8x32xf32>
    %2 = tpu.matmul %0, %1, %cst {dimension_numbers = #tpu.dot_dimension_numbers<[1], [0], [0], [1], [0, 0, 1, 1], [], []>} : vector<8x32xf32>, vector<32x32xf32>, vector<8x32xf32> -> vector<8x32xf32>
    %c0_3 = arith.constant 0 : index
    %c0_4 = arith.constant 0 : index
    %3 = vector.load %arg3[%c0_3, %c0_4] : memref<1x32xf32, #tpu.memory_space<vmem>>, vector<1x32xf32>
    %4 = vector.broadcast %3 : vector<1x32xf32> to vector<8x32xf32>
    %5 = arith.addf %2, %4 : vector<8x32xf32>
    %cst_5 = arith.constant dense<0xFF800000> : vector<8xf32>
    %6 = vector.multi_reduction <maximumf>, %5, %cst_5 [1] : vector<8x32xf32> to vector<8xf32>
    %7 = vector.shape_cast %6 : vector<8xf32> to vector<8x1xf32>
    %8 = vector.broadcast %7 : vector<8x1xf32> to vector<8x32xf32>
    %9 = arith.subf %5, %8 : vector<8x32xf32>
    %10 = math.exp %9 : vector<8x32xf32>
    %cst_6 = arith.constant dense<0.000000e+00> : vector<8xf32>
    %11 = vector.multi_reduction <add>, %10, %cst_6 [1] : vector<8x32xf32> to vector<8xf32>
    %12 = vector.shape_cast %11 : vector<8xf32> to vector<8x1xf32>
    %13 = tpu.reciprocal %12 {approx = true} : vector<8x1xf32> -> vector<8x1xf32>
    %14 = vector.broadcast %13 : vector<8x1xf32> to vector<8x32xf32>
    %15 = arith.mulf %10, %14 : vector<8x32xf32>
    %16 = arith.mulf %0, %15 : vector<8x32xf32>
    %c0_7 = arith.constant 0 : index
    %c0_8 = arith.constant 0 : index
    %17 = vector.load %arg4[%c0_7, %c0_8] : memref<32x128xf32, #tpu.memory_space<vmem>>, vector<32x128xf32>
    %cst_9 = arith.constant dense<0.000000e+00> : vector<8x128xf32>
    %18 = tpu.matmul %16, %17, %cst_9 {dimension_numbers = #tpu.dot_dimension_numbers<[1], [0], [0], [1], [0, 0, 1, 1], [], []>} : vector<8x32xf32>, vector<32x128xf32>, vector<8x128xf32> -> vector<8x128xf32>
    %c0_10 = arith.constant 0 : index
    %c0_11 = arith.constant 0 : index
    %19 = vector.load %arg5[%c0_10, %c0_11] : memref<1x128xf32, #tpu.memory_space<vmem>>, vector<1x128xf32>
    %20 = vector.broadcast %19 : vector<1x128xf32> to vector<8x128xf32>
    %21 = arith.addf %18, %20 : vector<8x128xf32>
    %c0_12 = arith.constant 0 : index
    %c0_13 = arith.constant 0 : index
    %22 = vector.load %arg6[%c0_12, %c0_13] : memref<8x128xf32, #tpu.memory_space<vmem>>, vector<8x128xf32>
    tpu.vector_store %arg6[%c0_12, %c0_13], %21 {strides = array<i32>} : memref<8x128xf32, #tpu.memory_space<vmem>>, vector<8x128xf32>,
    return
  }
  func.func @transform_0(%arg0: i32) -> (i32, i32) {
    %c0_i32 = arith.constant 0 : i32
    %c0_i32_0 = arith.constant 0 : i32
    return %arg0, %c0_i32 : i32, i32
  }
  func.func @transform_1(%arg0: i32) -> (i32, i32) {
    %c0_i32 = arith.constant 0 : i32
    %c0_i32_0 = arith.constant 0 : i32
    %c0_i32_1 = arith.constant 0 : i32
    return %c0_i32, %c0_i32_0 : i32, i32
  }
  func.func @transform_2(%arg0: i32) -> (i32, i32) {
    %c0_i32 = arith.constant 0 : i32
    %c0_i32_0 = arith.constant 0 : i32
    %c0_i32_1 = arith.constant 0 : i32
    return %c0_i32, %c0_i32_0 : i32, i32
  }
  func.func @transform_3(%arg0: i32) -> (i32, i32) {
    %c0_i32 = arith.constant 0 : i32
    %c0_i32_0 = arith.constant 0 : i32
    %c0_i32_1 = arith.constant 0 : i32
    return %c0_i32, %c0_i32_0 : i32, i32
  }
  func.func @transform_4(%arg0: i32) -> (i32, i32) {
    %c0_i32 = arith.constant 0 : i32
    %c0_i32_0 = arith.constant 0 : i32
    %c0_i32_1 = arith.constant 0 : i32
    return %c0_i32, %c0_i32_0 : i32, i32
  }
  func.func @transform_5(%arg0: i32) -> (i32, i32) {
    %c0_i32 = arith.constant 0 : i32
    %c0_i32_0 = arith.constant 0 : i32
    return %arg0, %c0_i32 : i32, i32
  }
}

</mosaic_0001>

<llo_original>
// kernel: multiclass_forward_kernel.1
$region0: #{multiclass_forward_kernel.1}
  #allocation0 [shape = 'u32[]', space=smem, size = 0x4, offset = 0x4, fixed_abs, tag = 'smem constant byte address 0x4 - core index']
  #allocation1 [shape = 'u32[144,128]{1,0:T(1,128)}', space=vmem, size = 0x12000, scoped, tag = 'internal scratch']
  %s0 = inlined_call_operand.vmem [shape: f32[8,32], index: 0, kind: input, shape index: {}]
  %s1 = inlined_call_operand.hbm [shape: f32[32,32], index: 1, kind: input, shape index: {}]
  %s2 = inlined_call_operand.vmem [shape: f32[1,32], index: 2, kind: input, shape index: {}]
  %s3 = inlined_call_operand.hbm [shape: f32[32,128], index: 3, kind: input, shape index: {}]
  %s4 = inlined_call_operand.vmem [shape: f32[1,128], index: 4, kind: input, shape index: {}]
  %s5 = inlined_call_operand.vmem [shape: f32[8,128], index: 5, kind: output, shape index: {}]
  %s6 = sld [smem:[#allocation0]]
  $region38: #{multiclass_forward_kernel.1} parent=0
    _
  %s8 = ssub.s32 1, %s6
  %s9 = scalar_select 0, %s8, %s6
  $region1: #{multiclass_forward_kernel.1} parent=0
    #allocation2 [shape = 'u8[16384]{0}', space=vmem, size = 0x4000, scoped, tag = 'input window, operand 1, single buffered']
    #allocation3 [shape = 's32[1]{0}', space=sflag, size = 0x4, scoped, tag = 'scoped memory for multiclass_forward_kernel.1']
    #allocation4 [shape = 'u8[16384]{0}', space=vmem, size = 0x4000, scoped, tag = 'input window, operand 3, single buffered']
    #allocation5 [shape = 's32[1]{0}', space=sflag, size = 0x4, scoped, tag = 'scoped memory for multiclass_forward_kernel.1']
    %10 = vsyncpa [#allocation3], 0
    %11 = vsyncpa [#allocation5], 0
    // Predicated region
    $region2: #{multiclass_forward_kernel.1} parent=1 // pred_check
      _
    $region3: #{multiclass_forward_kernel.1} parent=1 // pred_check_branch
      %13 = sbr.rel (0) target = $region5
    $region4: #{multiclass_forward_kernel.1} parent=1 // pred_region
      _
    $region5: #{multiclass_forward_kernel.1} parent=1 // pred_fallthru
      _
    // Predicated region
    $region6: #{multiclass_forward_kernel.1} parent=1 // pred_check
      _
    $region7: #{multiclass_forward_kernel.1} parent=1 // pred_check_branch
      %15 = sbr.rel (0) target = $region9
    $region8: #{multiclass_forward_kernel.1} parent=1 // pred_region
      %s17 = ssub.s32 512, 512
      %18 = vsyncadd [#allocation3], %s17
      %s19 = sshll.u32 [#allocation2], 4
      %s20 = int_to_ptr.vmem [resolvable:$true] %s19
      %25 = dma.hbm_to_vmem [thread:$0]  %s1, 512, %s20, [#allocation3], 128, 128, 8
    $region9: #{multiclass_forward_kernel.1} parent=1 // pred_fallthru
      _
    // Predicated region
    $region10: #{multiclass_forward_kernel.1} parent=1 // pred_check
      _
    $region11: #{multiclass_forward_kernel.1} parent=1 // pred_check_branch
      %27 = sbr.rel (0) target = $region13
    $region12: #{multiclass_forward_kernel.1} parent=1 // pred_region
      _
    $region13: #{multiclass_forward_kernel.1} parent=1 // pred_fallthru
      _
    // Predicated region
    $region14: #{multiclass_forward_kernel.1} parent=1 // pred_check
      _
    $region15: #{multiclass_forward_kernel.1} parent=1 // pred_check_branch
      %29 = sbr.rel (0) target = $region17
    $region16: #{multiclass_forward_kernel.1} parent=1 // pred_region
      %s31 = ssub.s32 512, 512
      %32 = vsyncadd [#allocation5], %s31
      %s33 = sshll.u32 [#allocation4], 4
      %s34 = int_to_ptr.vmem [resolvable:$true] %s33
      %39 = dma.hbm_to_vmem [thread:$0]  %s3, 512, %s34, [#allocation5], 128, 128, 8
    $region17: #{multiclass_forward_kernel.1} parent=1 // pred_fallthru
      _
    // Predicated region
    $region18: #{multiclass_forward_kernel.1} parent=1 // pred_check
      _
    $region19: #{multiclass_forward_kernel.1} parent=1 // pred_check_branch
      %41 = sbr.rel (0) target = $region21
    $region20: #{multiclass_forward_kernel.1} parent=1 // pred_region
      _
    $region21: #{multiclass_forward_kernel.1} parent=1 // pred_fallthru
      _
    // Predicated region
    $region22: #{multiclass_forward_kernel.1} parent=1 // pred_check
      _
    $region23: #{multiclass_forward_kernel.1} parent=1 // pred_check_branch
      %43 = sbr.rel (0) target = $region25
    $region24: #{multiclass_forward_kernel.1} parent=1 // pred_region
      %44 = dma.done [#allocation3], 512
    $region25: #{multiclass_forward_kernel.1} parent=1 // pred_fallthru
      _
    // Predicated region
    $region26: #{multiclass_forward_kernel.1} parent=1 // pred_check
      _
    $region27: #{multiclass_forward_kernel.1} parent=1 // pred_check_branch
      %46 = sbr.rel (0) target = $region29
    $region28: #{multiclass_forward_kernel.1} parent=1 // pred_region
      %47 = dma.done [#allocation5], 512
    $region29: #{multiclass_forward_kernel.1} parent=1 // pred_fallthru
      _
    %v48 = vld [vmem:[%s0] sm:$0xff]
    %v49 = vld [vmem:[#allocation2] sm:$0xff]
    %v50 = vld [vmem:[#allocation2 + $0x8] sm:$0xff]
    %v51 = vld [vmem:[#allocation2 + $0x10] sm:$0xff]
    %v52 = vld [vmem:[#allocation2 + $0x18] sm:$0xff]
    %v53 = vld [vmem:[%s2] sm:$0x1]
    %v55 = vlaneseq
    %v56 = vshrl.u32 %v55, 7
    %v57 = vsub.s32 0, %v56
    %v58 = vrot.slane %v53, %v57
    %vm60 = vcmask 261120
    %v62 = vsel %vm60, %v48, 0
    %64 = vmatprep.subr.mxu0 0.0
    %65 = vmatpush1.msra.mxu0 %v49
    %66 = vmatprep.subr.mxu0 0.0
    %67 = vmatpush1.msra.mxu0 %v50
    %68 = vmatprep.subr.mxu0 0.0
    %69 = vmatpush1.msra.mxu0 %v51
    %70 = vmatprep.subr.mxu0 0.0
    %71 = vmatpush1.msra.mxu0 %v52
    %72 = vmatprep.subr.mxu0 0.0
    %73 = vmatpush1.msra.mxu0 0.0
    %74 = vmatprep.subr.mxu0 0.0
    %75 = vmatpush1.msra.mxu0 0.0
    %76 = vmatprep.subr.mxu0 0.0
    %77 = vmatpush1.msra.mxu0 0.0
    %78 = vmatprep.subr.mxu0 0.0
    %79 = vmatpush1.msra.mxu0 0.0
    %80 = vmatprep.subr.mxu0 0.0
    %81 = vmatpush1.msra.mxu0 0.0
    %82 = vmatprep.subr.mxu0 0.0
    %83 = vmatpush1.msra.mxu0 0.0
    %84 = vmatprep.subr.mxu0 0.0
    %85 = vmatpush1.msra.mxu0 0.0
    %86 = vmatprep.subr.mxu0 0.0
    %87 = vmatpush1.msra.mxu0 0.0
    %88 = vmatprep.subr.mxu0 0.0
    %89 = vmatpush1.msra.mxu0 0.0
    %90 = vmatprep.subr.mxu0 0.0
    %91 = vmatpush1.msra.mxu0 0.0
    %92 = vmatprep.subr.mxu0 0.0
    %93 = vmatpush1.msra.mxu0 0.0
    %94 = vmatprep.subr.mxu0 0.0
    %95 = vmatpush1.msra.mxu0 0.0
    %96 = vmatprep.subr.mxu0 0.0
    %97 = vmatpush1.msra.mxu0 0.0
    %98 = vmatprep.subr.mxu0 0.0
    %99 = vmatpush1.msra.mxu0 0.0
    %100 = vmatprep.subr.mxu0 0.0
    %101 = vmatpush1.msra.mxu0 0.0
    %102 = vmatprep.subr.mxu0 0.0
    %103 = vmatpush1.msra.mxu0 0.0
    %104 = vmatprep.subr.mxu0 0.0
    %105 = vmatpush1.msra.mxu0 0.0
    %106 = vmatprep.subr.mxu0 0.0
    %107 = vmatpush1.msra.mxu0 0.0
    %108 = vmatprep.subr.mxu0 0.0
    %109 = vmatpush1.msra.mxu0 0.0
    %110 = vmatprep.subr.mxu0 0.0
    %111 = vmatpush1.msra.mxu0 0.0
    %112 = vmatprep.subr.mxu0 0.0
    %113 = vmatpush1.msra.mxu0 0.0
    %114 = vmatprep.subr.mxu0 0.0
    %115 = vmatpush1.msra.mxu0 0.0
    %116 = vmatprep.subr.mxu0 0.0
    %117 = vmatpush1.msra.mxu0 0.0
    %118 = vmatprep.subr.mxu0 0.0
    %119 = vmatpush1.msra.mxu0 0.0
    %120 = vmatprep.subr.mxu0 0.0
    %121 = vmatpush1.msra.mxu0 0.0
    %122 = vmatprep.subr.mxu0 0.0
    %123 = vmatpush1.msra.mxu0 0.0
    %124 = vmatprep.subr.mxu0 0.0
    %125 = vmatpush1.msra.mxu0 0.0
    %126 = vmatprep.subr.mxu0 0.0
    %127 = vmatpush1.msra.mxu0 0.0
    %128 = vmatprep.mubr.f32.mxu0 0.0
    %129 = vmatmul.mubr.f32.gmra.mrb[0].mxu0 %v62
    %v130 = vpop.f32.mrb[0].mxu0
    %v131 = vadd.f32 %v58, %v130
    %v132 = vpop.f32.mrb[0].mxu0
    %133 = vdwg.mxu0
    %v134 = vsel %vm60, %v131, -inf
    %135 = vmax.xlane.f32.xlu0 %v134
    %v136 = vpop.xlane.xlu0 %135
    %v137 = vsub.f32 %v131, %v136
    %v138 = vmul.f32 %v137, 1.442695
    %v139 = vpow.pop %v138
    %v140 = vsel %vm60, %v139, 0.0
    %141 = vadd.xlane.f32.xlu0 %v140
    %v142 = vpop.xlane.xlu0 %141
    %v143 = vrcp.pop %v142
    %v144 = vmul.f32 %v139, %v143
    %v145 = vmul.f32 %v48, %v144
    %v146 = vld [vmem:[#allocation4] sm:$0xff]
    %v147 = vld [vmem:[#allocation4 + $0x8] sm:$0xff]
    %v148 = vld [vmem:[#allocation4 + $0x10] sm:$0xff]
    %v149 = vld [vmem:[#allocation4 + $0x18] sm:$0xff]
    %v150 = vld [vmem:[%s4] sm:$0x1]
    %v152 = vlaneseq
    %v153 = vshrl.u32 %v152, 7
    %v154 = vsub.s32 0, %v153
    %v155 = vrot.slane %v150, %v154
    %v158 = vsel %vm60, %v145, 0
    %160 = vmatprep.subr.mxu0 0.0
    %161 = vmatpush1.msra.mxu0 %v146
    %162 = vmatprep.subr.mxu0 0.0
    %163 = vmatpush1.msra.mxu0 %v147
    %164 = vmatprep.subr.mxu0 0.0
    %165 = vmatpush1.msra.mxu0 %v148
    %166 = vmatprep.subr.mxu0 0.0
    %167 = vmatpush1.msra.mxu0 %v149
    %168 = vmatprep.subr.mxu0 0.0
    %169 = vmatpush1.msra.mxu0 0.0
    %170 = vmatprep.subr.mxu0 0.0
    %171 = vmatpush1.msra.mxu0 0.0
    %172 = vmatprep.subr.mxu0 0.0
    %173 = vmatpush1.msra.mxu0 0.0
    %174 = vmatprep.subr.mxu0 0.0
    %175 = vmatpush1.msra.mxu0 0.0
    %176 = vmatprep.subr.mxu0 0.0
    %177 = vmatpush1.msra.mxu0 0.0
    %178 = vmatprep.subr.mxu0 0.0
    %179 = vmatpush1.msra.mxu0 0.0
    %180 = vmatprep.subr.mxu0 0.0
    %181 = vmatpush1.msra.mxu0 0.0
    %182 = vmatprep.subr.mxu0 0.0
    %183 = vmatpush1.msra.mxu0 0.0
    %184 = vmatprep.subr.mxu0 0.0
    %185 = vmatpush1.msra.mxu0 0.0
    %186 = vmatprep.subr.mxu0 0.0
    %187 = vmatpush1.msra.mxu0 0.0
    %188 = vmatprep.subr.mxu0 0.0
    %189 = vmatpush1.msra.mxu0 0.0
    %190 = vmatprep.subr.mxu0 0.0
    %191 = vmatpush1.msra.mxu0 0.0
    %192 = vmatprep.subr.mxu0 0.0
    %193 = vmatpush1.msra.mxu0 0.0
    %194 = vmatprep.subr.mxu0 0.0
    %195 = vmatpush1.msra.mxu0 0.0
    %196 = vmatprep.subr.mxu0 0.0
    %197 = vmatpush1.msra.mxu0 0.0
    %198 = vmatprep.subr.mxu0 0.0
    %199 = vmatpush1.msra.mxu0 0.0
    %200 = vmatprep.subr.mxu0 0.0
    %201 = vmatpush1.msra.mxu0 0.0
    %202 = vmatprep.subr.mxu0 0.0
    %203 = vmatpush1.msra.mxu0 0.0
    %204 = vmatprep.subr.mxu0 0.0
    %205 = vmatpush1.msra.mxu0 0.0
    %206 = vmatprep.subr.mxu0 0.0
    %207 = vmatpush1.msra.mxu0 0.0
    %208 = vmatprep.subr.mxu0 0.0
    %209 = vmatpush1.msra.mxu0 0.0
    %210 = vmatprep.subr.mxu0 0.0
    %211 = vmatpush1.msra.mxu0 0.0
    %212 = vmatprep.subr.mxu0 0.0
    %213 = vmatpush1.msra.mxu0 0.0
    %214 = vmatprep.subr.mxu0 0.0
    %215 = vmatpush1.msra.mxu0 0.0
    %216 = vmatprep.subr.mxu0 0.0
    %217 = vmatpush1.msra.mxu0 0.0
    %218 = vmatprep.subr.mxu0 0.0
    %219 = vmatpush1.msra.mxu0 0.0
    %220 = vmatprep.subr.mxu0 0.0
    %221 = vmatpush1.msra.mxu0 0.0
    %222 = vmatprep.subr.mxu0 0.0
    %223 = vmatpush1.msra.mxu0 0.0
    %224 = vmatprep.mubr.f32.mxu0 0.0
    %225 = vmatmul.mubr.f32.gmra.mrb[0].mxu0 %v158
    %v226 = vpop.f32.mrb[0].mxu0
    %v227 = vadd.f32 %v155, %v226
    %v228 = vpop.f32.mrb[0].mxu0
    %229 = vdwg.mxu0
    %230 = vst [vmem:[%s5] sm:$0xff] %v227
    // Predicated region
    $region30: #{multiclass_forward_kernel.1} parent=1 // pred_check
      _
    $region31: #{multiclass_forward_kernel.1} parent=1 // pred_check_branch
      %232 = sbr.rel (0) target = $region33
    $region32: #{multiclass_forward_kernel.1} parent=1 // pred_region
      _
    $region33: #{multiclass_forward_kernel.1} parent=1 // pred_fallthru
      _
    // Predicated region
    $region34: #{multiclass_forward_kernel.1} parent=1 // pred_check
      _
    $region35: #{multiclass_forward_kernel.1} parent=1 // pred_check_branch
      %234 = sbr.rel (0) target = $region37
    $region36: #{multiclass_forward_kernel.1} parent=1 // pred_region
      _
    $region37: #{multiclass_forward_kernel.1} parent=1 // pred_fallthru
      _
    %235 = vsyncpa [#allocation3], 1
    %236 = vsyncpa [#allocation5], 1

</llo_original>
